<compile_context>
chip_gen: v5e
topology: v5e:2x2
jax: 0.10.0
libtpu: 0.0.40
codegen_flags: <defaults>
</compile_context>

<pallas_src>
import functools

import jax
import jax.numpy as jnp
import numpy as np
from jax.experimental import pallas as pl
from jax.experimental.pallas import tpu as pltpu

LEAKY_SLOPE = 0.01   # nn.LeakyReLU default
BN_EPS = 1e-5        # nn.BatchNorm1d default


def _layer_plan(layer_shape):
    """List of (d_in, d_out, has_bn) replicating Encoder + Decoder structure."""
    plan = []
    # Encoder: FullyConnectedBlock (with BN) for every consecutive pair.
    for d_in, d_out in zip(layer_shape[:-1], layer_shape[1:]):
        plan.append((d_in, d_out, True))
    # Decoder: reversed shape; BN blocks for all but the last pair, then a bare Linear.
    rev = layer_shape[::-1]
    for d_in, d_out in zip(rev[:-2], rev[1:-1]):
        plan.append((d_in, d_out, True))
    plan.append((rev[-2], rev[-1], False))
    return plan


def _make_kernel(num_layers, d_max, in_dim, out_dim, batch):
    """Fused kernel over uniformly padded layers.

    x_ref   : (batch, in_dim)              -- natural (N, C) layout
    p_ref   : (num_layers, d_max, d_max+3) -- per layer: [W_padded | bias | gamma | beta]
    out_ref : (batch, out_dim)

    Internally activations run transposed as (C, N): features on sublanes, the batch on
    the 128-lane axis (lane-dense VPU/BN work, single MXU matmul W @ h per layer).
    The FullAutoEncoder structure guarantees every layer except the last has LeakyReLU+BN.
    """

    def kernel(x_ref, p_ref, out_ref):
        inv_n = jnp.float32(1.0 / batch)

        # In-kernel layout flip (XLU): (N, C) -> (C, N).
        h = x_ref[...].astype(jnp.float32).T                     # (in_dim, N)
        if in_dim < d_max:                                       # pad feature rows to d_max
            h = jnp.concatenate(
                [h, jnp.zeros((d_max - in_dim, batch), jnp.float32)], axis=0)

        for l in range(num_layers):
            blk = p_ref[l]                                       # (d_max, d_max+3)
            w = blk[:, :d_max]                                   # (d_max, d_max) zero-padded
            b = blk[:, d_max:d_max + 1]                          # (d_max, 1)

            # Linear on the MXU, batch on lanes.
            y = jnp.dot(w, h, preferred_element_type=jnp.float32) + b   # (d_max, N)

            if l < num_layers - 1:
                gamma = blk[:, d_max + 1:d_max + 2]              # (d_max, 1)
                beta = blk[:, d_max + 2:d_max + 3]               # (d_max, 1)
                # Dropout: eval-mode identity.
                # TODO(synk): stochastic training dropout not emulated.
                # LeakyReLU (single VALU op; valid for slope in (0,1)).
                y = jnp.maximum(y, LEAKY_SLOPE * y)
                # BatchNorm1d with batch statistics, two-pass (matches reference math).
                mean = jnp.sum(y, axis=-1, keepdims=True) * inv_n
                d = y - mean
                var = jnp.sum(d * d, axis=-1, keepdims=True) * inv_n
                scale = gamma * jax.lax.rsqrt(var + BN_EPS)      # EUP rsqrt
                h = d * scale + beta                             # fused affine
            else:
                # Final plain Linear (decoder tail): no dropout / activation / BN.
                h = y

        # Layout flip back (XLU): (C, N) -> (N, C) and store.
        out_ref[...] = h[:out_dim, :].T.astype(out_ref.dtype)

    return kernel


def init_params(key, layer_shape):
    """Deterministic PyTorch-style init.

    Returns:
      slab   : (L, d_max, d_max+3) f32 -- per-layer zero-padded [W | bias | gamma | beta],
               the single parameter operand for the kernel.
      layers : list of (w, b, gamma, beta, has_bn) unpadded arrays for the pure-JAX reference.
      plan   : list of (d_in, d_out, has_bn).
    """
    plan = _layer_plan(layer_shape)
    d_max = max(layer_shape)
    layers = []
    blocks = []
    for (d_in, d_out, has_bn) in plan:
        key, kw, kb = jax.random.split(key, 3)
        bound = 1.0 / np.sqrt(d_in)
        w = jax.random.uniform(kw, (d_out, d_in), jnp.float32, -bound, bound)
        b = jax.random.uniform(kb, (d_out,), jnp.float32, -bound, bound)
        if has_bn:
            key, kg, kbe = jax.random.split(key, 3)
            gamma = 1.0 + 0.1 * jax.random.normal(kg, (d_out,), jnp.float32)
            beta = 0.1 * jax.random.normal(kbe, (d_out,), jnp.float32)
        else:
            gamma = jnp.ones((d_out,), jnp.float32)
            beta = jnp.zeros((d_out,), jnp.float32)
        layers.append((w, b, gamma, beta, has_bn))

        blk = jnp.zeros((d_max, d_max + 3), jnp.float32)
        blk = blk.at[:d_out, :d_in].set(w)
        blk = blk.at[:d_out, d_max].set(b)
        blk = blk.at[:d_out, d_max + 1].set(gamma)
        blk = blk.at[:d_out, d_max + 2].set(beta)
        blocks.append(blk)

    slab = jnp.stack(blocks, axis=0)                             # (L, d_max, d_max+3)
    return slab, layers, plan


@functools.partial(jax.jit, static_argnums=(2, 3))
def full_autoencoder_forward(x, slab, num_layers, out_dim):
    """x: (N, C) like the PyTorch module; returns (N, out_dim).  No wrapper transposes —
    layout plumbing happens inside the single fused kernel."""
    batch, in_dim = x.shape
    d_max = slab.shape[1]

    kernel = _make_kernel(num_layers, d_max, in_dim, out_dim, batch)

    matmul_flops = 2 * batch * d_max * d_max * num_layers
    elementwise_flops = 8 * batch * d_max * (num_layers - 1)
    cost = pl.CostEstimate(
        flops=matmul_flops + elementwise_flops,
        transcendentals=(num_layers - 1) * d_max,                # rsqrt per BN feature row
        bytes_accessed=4 * (x.size + slab.size + batch * out_dim),
    )

    # No grid: single invocation, whole (tiny) arrays VMEM-resident, no 1-step pipeline
    # scaffolding.  BatchNorm couples the whole batch, so it must stay resident anyway.
    return pl.pallas_call(
        kernel,
        out_shape=jax.ShapeDtypeStruct((batch, out_dim), x.dtype),
        in_specs=[
            pl.BlockSpec(memory_space=pltpu.MemorySpace.VMEM),   # x
            pl.BlockSpec(memory_space=pltpu.MemorySpace.VMEM),   # parameter slab
        ],
        out_specs=pl.BlockSpec(memory_space=pltpu.MemorySpace.VMEM),
        cost_estimate=cost,
    )(x, slab)


def _reference_forward(x, layers):
    """Pure-JAX reference matching the PyTorch module (train-mode BN, eval-mode dropout,
    NO activation/BN after the final plain Linear)."""
    h = x                                                        # (N, C)
    for (w, b, gamma, beta, has_bn) in layers:
        y = h @ w.T + b
        if has_bn:
            y = jnp.where(y >= 0, y, LEAKY_SLOPE * y)
            mean = jnp.mean(y, axis=0)
            var = jnp.mean((y - mean) ** 2, axis=0)
            y = (y - mean) / jnp.sqrt(var + BN_EPS) * gamma + beta
        h = y
    return h


if __name__ == "__main__":
    key = jax.random.PRNGKey(0)
    layer_shape = [32, 16, 8]          # input dim 32 -> latent 8 -> back to 32
    batch = 128                        # multiple of 128 -> batch rides the lane axis

    key, kx, kp = jax.random.split(key, 3)
    x = jax.random.normal(kx, (batch, layer_shape[0]), jnp.float32)

    slab, layers, plan = init_params(kp, layer_shape)
    num_layers = len(plan)

    out = full_autoencoder_forward(x, slab, num_layers, layer_shape[0])
    out = jax.block_until_ready(out)

    ref = _reference_forward(x, layers)
    assert out.shape == (batch, layer_shape[0])
    np.testing.assert_allclose(np.asarray(out), np.asarray(ref), rtol=1e-4, atol=1e-4)

    print("KERNEL_OK")
</pallas_src>

<mosaic_0001>
module attributes {stable_mosaic.version = 11 : i64} {
  func.func @kernel(%arg0: memref<128x32xf32, #tpu.memory_space<vmem>>, %arg1: memref<4x32x35xf32, #tpu.memory_space<vmem>>, %arg2: memref<128x32xf32, #tpu.memory_space<vmem>>) attributes {dimension_semantics = [], scalar_prefetch = 0 : i64, scratch_operands = 0 : i64, tpu.core_type = #tpu.core_type<tc>} {
    %c0 = arith.constant 0 : index
    %c0_0 = arith.constant 0 : index
    %0 = vector.load %arg0[%c0, %c0_0] : memref<128x32xf32, #tpu.memory_space<vmem>>, vector<128x32xf32>
    %1 = tpu.transpose %0, [1, 0] : vector<128x32xf32> -> vector<32x128xf32>
    %c0_1 = arith.constant 0 : index
    %c0_2 = arith.constant 0 : index
    %c0_3 = arith.constant 0 : index
    %2 = vector.load %arg1[%c0_1, %c0_2, %c0_3] : memref<4x32x35xf32, #tpu.memory_space<vmem>>, vector<1x32x35xf32>
    %3 = vector.shape_cast %2 : vector<1x32x35xf32> to vector<32x35xf32>
    %4 = vector.extract_strided_slice %3 {offsets = [0, 0], sizes = [32, 32], strides = [1, 1]} : vector<32x35xf32> to vector<32x32xf32>
    %5 = vector.extract_strided_slice %3 {offsets = [0, 32], sizes = [32, 1], strides = [1, 1]} : vector<32x35xf32> to vector<32x1xf32>
    %cst = arith.constant dense<0.000000e+00> : vector<32x128xf32>
    %6 = tpu.matmul %4, %1, %cst {dimension_numbers = #tpu.dot_dimension_numbers<[1], [0], [0], [1], [0, 0, 1, 1], [], []>} : vector<32x32xf32>, vector<32x128xf32>, vector<32x128xf32> -> vector<32x128xf32>
    %7 = vector.broadcast %5 : vector<32x1xf32> to vector<32x128xf32>
    %8 = arith.addf %6, %7 : vector<32x128xf32>
    %9 = vector.extract_strided_slice %3 {offsets = [0, 33], sizes = [32, 1], strides = [1, 1]} : vector<32x35xf32> to vector<32x1xf32>
    %10 = vector.extract_strided_slice %3 {offsets = [0, 34], sizes = [32, 1], strides = [1, 1]} : vector<32x35xf32> to vector<32x1xf32>
    %cst_4 = arith.constant 0.00999999977 : f32
    %11 = vector.broadcast %cst_4 : f32 to vector<32x128xf32>
    %12 = arith.mulf %11, %8 : vector<32x128xf32>
    %13 = arith.maximumf %8, %12 : vector<32x128xf32>
    %cst_5 = arith.constant dense<0.000000e+00> : vector<32xf32>
    %14 = vector.multi_reduction <add>, %13, %cst_5 [1] : vector<32x128xf32> to vector<32xf32>
    %15 = vector.shape_cast %14 : vector<32xf32> to vector<32x1xf32>
    %cst_6 = arith.constant 7.812500e-03 : f32
    %16 = vector.broadcast %cst_6 : f32 to vector<32x1xf32>
    %17 = arith.mulf %15, %16 : vector<32x1xf32>
    %18 = vector.broadcast %17 : vector<32x1xf32> to vector<32x128xf32>
    %19 = arith.subf %13, %18 : vector<32x128xf32>
    %20 = arith.mulf %19, %19 : vector<32x128xf32>
    %cst_7 = arith.constant dense<0.000000e+00> : vector<32xf32>
    %21 = vector.multi_reduction <add>, %20, %cst_7 [1] : vector<32x128xf32> to vector<32xf32>
    %22 = vector.shape_cast %21 : vector<32xf32> to vector<32x1xf32>
    %cst_8 = arith.constant 7.812500e-03 : f32
    %23 = vector.broadcast %cst_8 : f32 to vector<32x1xf32>
    %24 = arith.mulf %22, %23 : vector<32x1xf32>
    %cst_9 = arith.constant 9.99999974E-6 : f32
    %25 = vector.broadcast %cst_9 : f32 to vector<32x1xf32>
    %26 = arith.addf %24, %25 : vector<32x1xf32>
    %27 = math.rsqrt %26 : vector<32x1xf32>
    %28 = arith.mulf %9, %27 : vector<32x1xf32>
    %29 = vector.broadcast %28 : vector<32x1xf32> to vector<32x128xf32>
    %30 = arith.mulf %19, %29 : vector<32x128xf32>
    %31 = vector.broadcast %10 : vector<32x1xf32> to vector<32x128xf32>
    %32 = arith.addf %30, %31 : vector<32x128xf32>
    %c1 = arith.constant 1 : index
    %c0_10 = arith.constant 0 : index
    %c0_11 = arith.constant 0 : index
    %33 = vector.load %arg1[%c1, %c0_10, %c0_11] : memref<4x32x35xf32, #tpu.memory_space<vmem>>, vector<1x32x35xf32>
    %34 = vector.shape_cast %33 : vector<1x32x35xf32> to vector<32x35xf32>
    %35 = vector.extract_strided_slice %34 {offsets = [0, 0], sizes = [32, 32], strides = [1, 1]} : vector<32x35xf32> to vector<32x32xf32>
    %36 = vector.extract_strided_slice %34 {offsets = [0, 32], sizes = [32, 1], strides = [1, 1]} : vector<32x35xf32> to vector<32x1xf32>
    %cst_12 = arith.constant dense<0.000000e+00> : vector<32x128xf32>
    %37 = tpu.matmul %35, %32, %cst_12 {dimension_numbers = #tpu.dot_dimension_numbers<[1], [0], [0], [1], [0, 0, 1, 1], [], []>} : vector<32x32xf32>, vector<32x128xf32>, vector<32x128xf32> -> vector<32x128xf32>
    %38 = vector.broadcast %36 : vector<32x1xf32> to vector<32x128xf32>
    %39 = arith.addf %37, %38 : vector<32x128xf32>
    %40 = vector.extract_strided_slice %34 {offsets = [0, 33], sizes = [32, 1], strides = [1, 1]} : vector<32x35xf32> to vector<32x1xf32>
    %41 = vector.extract_strided_slice %34 {offsets = [0, 34], sizes = [32, 1], strides = [1, 1]} : vector<32x35xf32> to vector<32x1xf32>
    %cst_13 = arith.constant 0.00999999977 : f32
    %42 = vector.broadcast %cst_13 : f32 to vector<32x128xf32>
    %43 = arith.mulf %42, %39 : vector<32x128xf32>
    %44 = arith.maximumf %39, %43 : vector<32x128xf32>
    %cst_14 = arith.constant dense<0.000000e+00> : vector<32xf32>
    %45 = vector.multi_reduction <add>, %44, %cst_14 [1] : vector<32x128xf32> to vector<32xf32>
    %46 = vector.shape_cast %45 : vector<32xf32> to vector<32x1xf32>
    %cst_15 = arith.constant 7.812500e-03 : f32
    %47 = vector.broadcast %cst_15 : f32 to vector<32x1xf32>
    %48 = arith.mulf %46, %47 : vector<32x1xf32>
    %49 = vector.broadcast %48 : vector<32x1xf32> to vector<32x128xf32>
    %50 = arith.subf %44, %49 : vector<32x128xf32>
    %51 = arith.mulf %50, %50 : vector<32x128xf32>
    %cst_16 = arith.constant dense<0.000000e+00> : vector<32xf32>
    %52 = vector.multi_reduction <add>, %51, %cst_16 [1] : vector<32x128xf32> to vector<32xf32>
    %53 = vector.shape_cast %52 : vector<32xf32> to vector<32x1xf32>
    %cst_17 = arith.constant 7.812500e-03 : f32
    %54 = vector.broadcast %cst_17 : f32 to vector<32x1xf32>
    %55 = arith.mulf %53, %54 : vector<32x1xf32>
    %cst_18 = arith.constant 9.99999974E-6 : f32
    %56 = vector.broadcast %cst_18 : f32 to vector<32x1xf32>
    %57 = arith.addf %55, %56 : vector<32x1xf32>
    %58 = math.rsqrt %57 : vector<32x1xf32>
    %59 = arith.mulf %40, %58 : vector<32x1xf32>
    %60 = vector.broadcast %59 : vector<32x1xf32> to vector<32x128xf32>
    %61 = arith.mulf %50, %60 : vector<32x128xf32>
    %62 = vector.broadcast %41 : vector<32x1xf32> to vector<32x128xf32>
    %63 = arith.addf %61, %62 : vector<32x128xf32>
    %c2 = arith.constant 2 : index
    %c0_19 = arith.constant 0 : index
    %c0_20 = arith.constant 0 : index
    %64 = vector.load %arg1[%c2, %c0_19, %c0_20] : memref<4x32x35xf32, #tpu.memory_space<vmem>>, vector<1x32x35xf32>
    %65 = vector.shape_cast %64 : vector<1x32x35xf32> to vector<32x35xf32>
    %66 = vector.extract_strided_slice %65 {offsets = [0, 0], sizes = [32, 32], strides = [1, 1]} : vector<32x35xf32> to vector<32x32xf32>
    %67 = vector.extract_strided_slice %65 {offsets = [0, 32], sizes = [32, 1], strides = [1, 1]} : vector<32x35xf32> to vector<32x1xf32>
    %cst_21 = arith.constant dense<0.000000e+00> : vector<32x128xf32>
    %68 = tpu.matmul %66, %63, %cst_21 {dimension_numbers = #tpu.dot_dimension_numbers<[1], [0], [0], [1], [0, 0, 1, 1], [], []>} : vector<32x32xf32>, vector<32x128xf32>, vector<32x128xf32> -> vector<32x128xf32>
    %69 = vector.broadcast %67 : vector<32x1xf32> to vector<32x128xf32>
    %70 = arith.addf %68, %69 : vector<32x128xf32>
    %71 = vector.extract_strided_slice %65 {offsets = [0, 33], sizes = [32, 1], strides = [1, 1]} : vector<32x35xf32> to vector<32x1xf32>
    %72 = vector.extract_strided_slice %65 {offsets = [0, 34], sizes = [32, 1], strides = [1, 1]} : vector<32x35xf32> to vector<32x1xf32>
    %cst_22 = arith.constant 0.00999999977 : f32
    %73 = vector.broadcast %cst_22 : f32 to vector<32x128xf32>
    %74 = arith.mulf %73, %70 : vector<32x128xf32>
    %75 = arith.maximumf %70, %74 : vector<32x128xf32>
    %cst_23 = arith.constant dense<0.000000e+00> : vector<32xf32>
    %76 = vector.multi_reduction <add>, %75, %cst_23 [1] : vector<32x128xf32> to vector<32xf32>
    %77 = vector.shape_cast %76 : vector<32xf32> to vector<32x1xf32>
    %cst_24 = arith.constant 7.812500e-03 : f32
    %78 = vector.broadcast %cst_24 : f32 to vector<32x1xf32>
    %79 = arith.mulf %77, %78 : vector<32x1xf32>
    %80 = vector.broadcast %79 : vector<32x1xf32> to vector<32x128xf32>
    %81 = arith.subf %75, %80 : vector<32x128xf32>
    %82 = arith.mulf %81, %81 : vector<32x128xf32>
    %cst_25 = arith.constant dense<0.000000e+00> : vector<32xf32>
    %83 = vector.multi_reduction <add>, %82, %cst_25 [1] : vector<32x128xf32> to vector<32xf32>
    %84 = vector.shape_cast %83 : vector<32xf32> to vector<32x1xf32>
    %cst_26 = arith.constant 7.812500e-03 : f32
    %85 = vector.broadcast %cst_26 : f32 to vector<32x1xf32>
    %86 = arith.mulf %84, %85 : vector<32x1xf32>
    %cst_27 = arith.constant 9.99999974E-6 : f32
    %87 = vector.broadcast %cst_27 : f32 to vector<32x1xf32>
    %88 = arith.addf %86, %87 : vector<32x1xf32>
    %89 = math.rsqrt %88 : vector<32x1xf32>
    %90 = arith.mulf %71, %89 : vector<32x1xf32>
    %91 = vector.broadcast %90 : vector<32x1xf32> to vector<32x128xf32>
    %92 = arith.mulf %81, %91 : vector<32x128xf32>
    %93 = vector.broadcast %72 : vector<32x1xf32> to vector<32x128xf32>
    %94 = arith.addf %92, %93 : vector<32x128xf32>
    %c3 = arith.constant 3 : index
    %c0_28 = arith.constant 0 : index
    %c0_29 = arith.constant 0 : index
    %95 = vector.load %arg1[%c3, %c0_28, %c0_29] : memref<4x32x35xf32, #tpu.memory_space<vmem>>, vector<1x32x35xf32>
    %96 = vector.shape_cast %95 : vector<1x32x35xf32> to vector<32x35xf32>
    %97 = vector.extract_strided_slice %96 {offsets = [0, 0], sizes = [32, 32], strides = [1, 1]} : vector<32x35xf32> to vector<32x32xf32>
    %98 = vector.extract_strided_slice %96 {offsets = [0, 32], sizes = [32, 1], strides = [1, 1]} : vector<32x35xf32> to vector<32x1xf32>
    %cst_30 = arith.constant dense<0.000000e+00> : vector<32x128xf32>
    %99 = tpu.matmul %97, %94, %cst_30 {dimension_numbers = #tpu.dot_dimension_numbers<[1], [0], [0], [1], [0, 0, 1, 1], [], []>} : vector<32x32xf32>, vector<32x128xf32>, vector<32x128xf32> -> vector<32x128xf32>
    %100 = vector.broadcast %98 : vector<32x1xf32> to vector<32x128xf32>
    %101 = arith.addf %99, %100 : vector<32x128xf32>
    %102 = tpu.transpose %101, [1, 0] : vector<32x128xf32> -> vector<128x32xf32>
    %c0_31 = arith.constant 0 : index
    %c0_32 = arith.constant 0 : index
    %103 = vector.load %arg2[%c0_31, %c0_32] : memref<128x32xf32, #tpu.memory_space<vmem>>, vector<128x32xf32>
    tpu.vector_store %arg2[%c0_31, %c0_32], %102 {strides = array<i32>} : memref<128x32xf32, #tpu.memory_space<vmem>>, vector<128x32xf32>,
    return
  }
}

</mosaic_0001>

<llo_original>
// kernel: full_autoencoder_forward.1
$region0: #{full_autoencoder_forward.1}
  #allocation0 [shape = 'u32[]', space=smem, size = 0x4, offset = 0x4, fixed_abs, tag = 'smem constant byte address 0x4 - core index']
  #allocation1 [shape = 'u32[72,128]{1,0:T(1,128)}', space=vmem, size = 0x9000, scoped, tag = 'internal scratch']
  %s0 = inlined_call_operand.vmem [shape: f32[128,32], index: 0, kind: input, shape index: {}]
  %s1 = inlined_call_operand.vmem [shape: f32[4,32,35], index: 1, kind: input, shape index: {}]
  %s2 = inlined_call_operand.vmem [shape: f32[128,32], index: 2, kind: output, shape index: {}]
  %s3 = sld [smem:[#allocation0]]
  $region18: #{full_autoencoder_forward.1} parent=0
    _
  %s5 = ssub.s32 1, %s3
  %s6 = scalar_select 0, %s5, %s3
  // Predicated region
  $region2: #{full_autoencoder_forward.1} parent=0 // pred_check
    _
  $region3: #{full_autoencoder_forward.1} parent=0 // pred_check_branch
    %8 = sbr.rel (0) target = $region5
  $region4: #{full_autoencoder_forward.1} parent=0 // pred_region
    _
  $region5: #{full_autoencoder_forward.1} parent=0 // pred_fallthru
    _
  // Predicated region
  $region6: #{full_autoencoder_forward.1} parent=0 // pred_check
    _
  $region7: #{full_autoencoder_forward.1} parent=0 // pred_check_branch
    %10 = sbr.rel (0) target = $region9
  $region8: #{full_autoencoder_forward.1} parent=0 // pred_region
    _
  $region9: #{full_autoencoder_forward.1} parent=0 // pred_fallthru
    _
  %v11 = vld [vmem:[%s0] sm:$0xff]
  %v12 = vld [vmem:[%s0 + $0x8] sm:$0xff]
  %v13 = vld [vmem:[%s0 + $0x10] sm:$0xff]
  %v14 = vld [vmem:[%s0 + $0x18] sm:$0xff]
  %v15 = vld [vmem:[%s0 + $0x20] sm:$0xff]
  %v16 = vld [vmem:[%s0 + $0x28] sm:$0xff]
  %v17 = vld [vmem:[%s0 + $0x30] sm:$0xff]
  %v18 = vld [vmem:[%s0 + $0x38] sm:$0xff]
  %v19 = vld [vmem:[%s0 + $0x40] sm:$0xff]
  %v20 = vld [vmem:[%s0 + $0x48] sm:$0xff]
  %v21 = vld [vmem:[%s0 + $0x50] sm:$0xff]
  %v22 = vld [vmem:[%s0 + $0x58] sm:$0xff]
  %v23 = vld [vmem:[%s0 + $0x60] sm:$0xff]
  %v24 = vld [vmem:[%s0 + $0x68] sm:$0xff]
  %v25 = vld [vmem:[%s0 + $0x70] sm:$0xff]
  %v26 = vld [vmem:[%s0 + $0x78] sm:$0xff]
  %v27 = vld [vmem:[%s1] sm:$0xff]
  %v28 = vld [vmem:[%s1 + $0x8] sm:$0xff]
  %v29 = vld [vmem:[%s1 + $0x10] sm:$0xff]
  %v30 = vld [vmem:[%s1 + $0x18] sm:$0xff]
  %32 = vset.pattern.permute.xlu0 32
  %33 = vperm.xlu0 %32, %v27
  %v34 = vpop.permute.xlu0 %33
  %37 = vset.pattern.permute.xlu0 32
  %38 = vperm.xlu0 %37, %v28
  %v39 = vpop.permute.xlu0 %38
  %42 = vset.pattern.permute.xlu0 32
  %43 = vperm.xlu0 %42, %v29
  %v44 = vpop.permute.xlu0 %43
  %47 = vset.pattern.permute.xlu0 32
  %48 = vperm.xlu0 %47, %v30
  %v49 = vpop.permute.xlu0 %48
  %vm51 = vcmask 261120
  %v52 = vsel %vm51, %v27, 0
  %v54 = vsel %vm51, %v28, 0
  %v56 = vsel %vm51, %v29, 0
  %v58 = vsel %vm51, %v30, 0
  %v61 = vsel %vm51, %v11, 0
  %v64 = vsel %vm51, %v12, 0
  %v67 = vsel %vm51, %v13, 0
  %v70 = vsel %vm51, %v14, 0
  %v73 = vsel %vm51, %v15, 0
  %v76 = vsel %vm51, %v16, 0
  %v79 = vsel %vm51, %v17, 0
  %v82 = vsel %vm51, %v18, 0
  %v85 = vsel %vm51, %v19, 0
  %v88 = vsel %vm51, %v20, 0
  %v91 = vsel %vm51, %v21, 0
  %v94 = vsel %vm51, %v22, 0
  %v97 = vsel %vm51, %v23, 0
  %v100 = vsel %vm51, %v24, 0
  %v103 = vsel %vm51, %v25, 0
  %v106 = vsel %vm51, %v26, 0
  %108 = vmatpush.xpose.msra.mxu0 %v106
  %109 = vmatpush.xpose.msra.mxu0 %v103
  %110 = vmatpush.xpose.msra.mxu0 %v100
  %111 = vmatpush.xpose.msra.mxu0 %v97
  %112 = vmatpush.xpose.msra.mxu0 %v94
  %113 = vmatpush.xpose.msra.mxu0 %v91
  %114 = vmatpush.xpose.msra.mxu0 %v88
  %115 = vmatpush.xpose.msra.mxu0 %v85
  %116 = vmatpush.xpose.msra.mxu0 %v82
  %117 = vmatpush.xpose.msra.mxu0 %v79
  %118 = vmatpush.xpose.msra.mxu0 %v76
  %119 = vmatpush.xpose.msra.mxu0 %v73
  %120 = vmatpush.xpose.msra.mxu0 %v70
  %121 = vmatpush.xpose.msra.mxu0 %v67
  %122 = vmatpush.xpose.msra.mxu0 %v64
  %123 = vmatpush.xpose.msra.mxu0 %v61
  %124 = vmatmul.f32.gmra.mxu0 %v52
  %v125 = vpop.f32.mrf.mxu0
  %v126 = vadd.f32 %v34, %v125
  %127 = vmatmul.f32.gmra.mxu0 %v54
  %v128 = vpop.f32.mrf.mxu0
  %v129 = vadd.f32 %v39, %v128
  %130 = vmatmul.f32.gmra.mxu0 %v56
  %v131 = vpop.f32.mrf.mxu0
  %v132 = vadd.f32 %v44, %v131
  %133 = vmatmul.f32.gmra.mxu0 %v58
  %v134 = vpop.f32.mrf.mxu0
  %v135 = vadd.f32 %v49, %v134
  %136 = vdwg.mxu0
  %v137 = vmul.f32 %v126, 0.01
  %v138 = vmul.f32 %v129, 0.01
  %v139 = vmul.f32 %v132, 0.01
  %v140 = vmul.f32 %v135, 0.01
  %v141 = vmax.f32 %v126, %v137
  %v142 = vmax.f32 %v129, %v138
  %v143 = vmax.f32 %v132, %v139
  %v144 = vmax.f32 %v135, %v140
  %145 = vadd.xlane.f32.xlu0 %v141
  %v146 = vpop.xlane.xlu0 %145
  %147 = vadd.xlane.f32.xlu0 %v142
  %v148 = vpop.xlane.xlu0 %147
  %149 = vadd.xlane.f32.xlu0 %v143
  %v150 = vpop.xlane.xlu0 %149
  %151 = vadd.xlane.f32.xlu0 %v144
  %v152 = vpop.xlane.xlu0 %151
  %v153 = vmul.f32 %v146, 0.0078125
  %v154 = vmul.f32 %v148, 0.0078125
  %v155 = vmul.f32 %v150, 0.0078125
  %v156 = vmul.f32 %v152, 0.0078125
  %v157 = vsub.f32 %v141, %v153
  %v158 = vsub.f32 %v142, %v154
  %v159 = vsub.f32 %v143, %v155
  %v160 = vsub.f32 %v144, %v156
  %v161 = vmul.f32 %v157, %v157
  %v162 = vmul.f32 %v158, %v158
  %v163 = vmul.f32 %v159, %v159
  %v164 = vmul.f32 %v160, %v160
  %165 = vadd.xlane.f32.xlu0 %v161
  %v166 = vpop.xlane.xlu0 %165
  %167 = vadd.xlane.f32.xlu0 %v162
  %v168 = vpop.xlane.xlu0 %167
  %169 = vadd.xlane.f32.xlu0 %v163
  %v170 = vpop.xlane.xlu0 %169
  %171 = vadd.xlane.f32.xlu0 %v164
  %v172 = vpop.xlane.xlu0 %171
  %v173 = vmul.f32 %v166, 0.0078125
  %v174 = vmul.f32 %v168, 0.0078125
  %v175 = vmul.f32 %v170, 0.0078125
  %v176 = vmul.f32 %v172, 0.0078125
  %v177 = vadd.f32 %v173, 1e-05
  %v178 = vadd.f32 %v174, 1e-05
  %v179 = vadd.f32 %v175, 1e-05
  %v180 = vadd.f32 %v176, 1e-05
  %v181 = vrsqrt.pop %v177
  %v182 = vmul.f32 %v181, %v177
  %v183 = vmul.f32 %v182, %v181
  %v184 = vmul.f32 0.5, %v183
  %v185 = vsub.f32 1.5, %v184
  %v186 = vmul.f32 %v181, %v185
  %vm187 = vweird.f32 %v177
  %vm188 = vweird.f32 %v181
  %vm189 = vmor %vm187, %vm188
  %v190 = vsel %vm189, %v181, %v186
  %v191 = vrsqrt.pop %v178
  %v192 = vmul.f32 %v191, %v178
  %v193 = vmul.f32 %v192, %v191
  %v194 = vmul.f32 0.5, %v193
  %v195 = vsub.f32 1.5, %v194
  %v196 = vmul.f32 %v191, %v195
  %vm197 = vweird.f32 %v178
  %vm198 = vweird.f32 %v191
  %vm199 = vmor %vm197, %vm198
  %v200 = vsel %vm199, %v191, %v196
  %v201 = vrsqrt.pop %v179
  %v202 = vmul.f32 %v201, %v179
  %v203 = vmul.f32 %v202, %v201
  %v204 = vmul.f32 0.5, %v203
  %v205 = vsub.f32 1.5, %v204
  %v206 = vmul.f32 %v201, %v205
  %vm207 = vweird.f32 %v179
  %vm208 = vweird.f32 %v201
  %vm209 = vmor %vm207, %vm208
  %v210 = vsel %vm209, %v201, %v206
  %v211 = vrsqrt.pop %v180
  %v212 = vmul.f32 %v211, %v180
  %v213 = vmul.f32 %v212, %v211
  %v214 = vmul.f32 0.5, %v213
  %v215 = vsub.f32 1.5, %v214
  %v216 = vmul.f32 %v211, %v215
  %vm217 = vweird.f32 %v180
  %vm218 = vweird.f32 %v211
  %vm219 = vmor %vm217, %vm218
  %v220 = vsel %vm219, %v211, %v216
  %v221 = vmul.f32 %v27, %v190
  %v222 = vmul.f32 %v28, %v200
  %v223 = vmul.f32 %v29, %v210
  %v224 = vmul.f32 %v30, %v220
  %226 = vset.pattern.permute.xlu0 33
  %227 = vperm.xlu0 %226, %v221
  %v228 = vpop.permute.xlu0 %227
  %231 = vset.pattern.permute.xlu0 33
  %232 = vperm.xlu0 %231, %v222
  %v233 = vpop.permute.xlu0 %232
  %236 = vset.pattern.permute.xlu0 33
  %237 = vperm.xlu0 %236, %v223
  %v238 = vpop.permute.xlu0 %237
  %241 = vset.pattern.permute.xlu0 33
  %242 = vperm.xlu0 %241, %v224
  %v243 = vpop.permute.xlu0 %242
  %v245 = vmul.f32 %v157, %v228
  %v246 = vmul.f32 %v158, %v233
  %v247 = vmul.f32 %v159, %v238
  %v248 = vmul.f32 %v160, %v243
  %249 = vset.pattern.permute.xlu0 34
  %250 = vperm.xlu0 %249, %v27
  %v251 = vpop.permute.xlu0 %250
  %253 = vset.pattern.permute.xlu0 34
  %254 = vperm.xlu0 %253, %v28
  %v255 = vpop.permute.xlu0 %254
  %257 = vset.pattern.permute.xlu0 34
  %258 = vperm.xlu0 %257, %v29
  %v259 = vpop.permute.xlu0 %258
  %261 = vset.pattern.permute.xlu0 34
  %262 = vperm.xlu0 %261, %v30
  %v263 = vpop.permute.xlu0 %262
  %v265 = vadd.f32 %v245, %v251
  %v266 = vadd.f32 %v246, %v255
  %v267 = vadd.f32 %v247, %v259
  %v268 = vadd.f32 %v248, %v263
  %s269 = scalar_lea.vmem %s1, 32
  %v270 = vld [vmem:[%s269] sm:$0xff]
  %v271 = vld [vmem:[%s269 + $0x8] sm:$0xff]
  %v272 = vld [vmem:[%s269 + $0x10] sm:$0xff]
  %v273 = vld [vmem:[%s269 + $0x18] sm:$0xff]
  %275 = vset.pattern.permute.xlu0 32
  %276 = vperm.xlu0 %275, %v270
  %v277 = vpop.permute.xlu0 %276
  %280 = vset.pattern.permute.xlu0 32
  %281 = vperm.xlu0 %280, %v271
  %v282 = vpop.permute.xlu0 %281
  %285 = vset.pattern.permute.xlu0 32
  %286 = vperm.xlu0 %285, %v272
  %v287 = vpop.permute.xlu0 %286
  %290 = vset.pattern.permute.xlu0 32
  %291 = vperm.xlu0 %290, %v273
  %v292 = vpop.permute.xlu0 %291
  %v294 = vsel %vm51, %v270, 0
  %v296 = vsel %vm51, %v271, 0
  %v298 = vsel %vm51, %v272, 0
  %v300 = vsel %vm51, %v273, 0
  %302 = vmatpush.msra.mxu0 0.0
  %303 = vmatpush.msra.mxu0 0.0
  %304 = vmatpush.msra.mxu0 0.0
  %305 = vmatpush.msra.mxu0 0.0
  %306 = vmatpush.msra.mxu0 0.0
  %307 = vmatpush.msra.mxu0 0.0
  %308 = vmatpush.msra.mxu0 0.0
  %309 = vmatpush.msra.mxu0 0.0
  %310 = vmatpush.msra.mxu0 0.0
  %311 = vmatpush.msra.mxu0 0.0
  %312 = vmatpush.msra.mxu0 0.0
  %313 = vmatpush.msra.mxu0 0.0
  %314 = vmatpush.msra.mxu0 %v268
  %315 = vmatpush.msra.mxu0 %v267
  %316 = vmatpush.msra.mxu0 %v266
  %317 = vmatpush.msra.mxu0 %v265
  %318 = vmatmul.f32.gmra.mxu0 %v294
  %v319 = vpop.f32.mrf.mxu0
  %v320 = vadd.f32 %v277, %v319
  %321 = vmatmul.f32.gmra.mxu0 %v296
  %v322 = vpop.f32.mrf.mxu0
  %v323 = vadd.f32 %v282, %v322
  %324 = vmatmul.f32.gmra.mxu0 %v298
  %v325 = vpop.f32.mrf.mxu0
  %v326 = vadd.f32 %v287, %v325
  %327 = vmatmul.f32.gmra.mxu0 %v300
  %v328 = vpop.f32.mrf.mxu0
  %v329 = vadd.f32 %v292, %v328
  %330 = vdwg.mxu0
  %v331 = vmul.f32 %v320, 0.01
  %v332 = vmul.f32 %v323, 0.01
  %v333 = vmul.f32 %v326, 0.01
  %v334 = vmul.f32 %v329, 0.01
  %v335 = vmax.f32 %v320, %v331
  %v336 = vmax.f32 %v323, %v332
  %v337 = vmax.f32 %v326, %v333
  %v338 = vmax.f32 %v329, %v334
  %339 = vadd.xlane.f32.xlu0 %v335
  %v340 = vpop.xlane.xlu0 %339
  %341 = vadd.xlane.f32.xlu0 %v336
  %v342 = vpop.xlane.xlu0 %341
  %343 = vadd.xlane.f32.xlu0 %v337
  %v344 = vpop.xlane.xlu0 %343
  %345 = vadd.xlane.f32.xlu0 %v338
  %v346 = vpop.xlane.xlu0 %345
  %v347 = vmul.f32 %v340, 0.0078125
  %v348 = vmul.f32 %v342, 0.0078125
  %v349 = vmul.f32 %v344, 0.0078125
  %v350 = vmul.f32 %v346, 0.0078125
  %v351 = vsub.f32 %v335, %v347
  %v352 = vsub.f32 %v336, %v348
  %v353 = vsub.f32 %v337, %v349
  %v354 = vsub.f32 %v338, %v350
  %v355 = vmul.f32 %v351, %v351
  %v356 = vmul.f32 %v352, %v352
  %v357 = vmul.f32 %v353, %v353
  %v358 = vmul.f32 %v354, %v354
  %359 = vadd.xlane.f32.xlu0 %v355
  %v360 = vpop.xlane.xlu0 %359
  %361 = vadd.xlane.f32.xlu0 %v356
  %v362 = vpop.xlane.xlu0 %361
  %363 = vadd.xlane.f32.xlu0 %v357
  %v364 = vpop.xlane.xlu0 %363
  %365 = vadd.xlane.f32.xlu0 %v358
  %v366 = vpop.xlane.xlu0 %365
  %v367 = vmul.f32 %v360, 0.0078125
  %v368 = vmul.f32 %v362, 0.0078125
  %v369 = vmul.f32 %v364, 0.0078125
  %v370 = vmul.f32 %v366, 0.0078125
  %v371 = vadd.f32 %v367, 1e-05
  %v372 = vadd.f32 %v368, 1e-05
  %v373 = vadd.f32 %v369, 1e-05
  %v374 = vadd.f32 %v370, 1e-05
  %v375 = vrsqrt.pop %v371
  %v376 = vmul.f32 %v375, %v371
  %v377 = vmul.f32 %v376, %v375
  %v378 = vmul.f32 0.5, %v377
  %v379 = vsub.f32 1.5, %v378
  %v380 = vmul.f32 %v375, %v379
  %vm381 = vweird.f32 %v371
  %vm382 = vweird.f32 %v375
  %vm383 = vmor %vm381, %vm382
  %v384 = vsel %vm383, %v375, %v380
  %v385 = vrsqrt.pop %v372
  %v386 = vmul.f32 %v385, %v372
  %v387 = vmul.f32 %v386, %v385
  %v388 = vmul.f32 0.5, %v387
  %v389 = vsub.f32 1.5, %v388
  %v390 = vmul.f32 %v385, %v389
  %vm391 = vweird.f32 %v372
  %vm392 = vweird.f32 %v385
  %vm393 = vmor %vm391, %vm392
  %v394 = vsel %vm393, %v385, %v390
  %v395 = vrsqrt.pop %v373
  %v396 = vmul.f32 %v395, %v373
  %v397 = vmul.f32 %v396, %v395
  %v398 = vmul.f32 0.5, %v397
  %v399 = vsub.f32 1.5, %v398
  %v400 = vmul.f32 %v395, %v399
  %vm401 = vweird.f32 %v373
  %vm402 = vweird.f32 %v395
  %vm403 = vmor %vm401, %vm402
  %v404 = vsel %vm403, %v395, %v400
  %v405 = vrsqrt.pop %v374
  %v406 = vmul.f32 %v405, %v374
  %v407 = vmul.f32 %v406, %v405
  %v408 = vmul.f32 0.5, %v407
  %v409 = vsub.f32 1.5, %v408
  %v410 = vmul.f32 %v405, %v409
  %vm411 = vweird.f32 %v374
  %vm412 = vweird.f32 %v405
  %vm413 = vmor %vm411, %vm412
  %v414 = vsel %vm413, %v405, %v410
  %v415 = vmul.f32 %v270, %v384
  %v416 = vmul.f32 %v271, %v394
  %v417 = vmul.f32 %v272, %v404
  %v418 = vmul.f32 %v273, %v414
  %420 = vset.pattern.permute.xlu0 33
  %421 = vperm.xlu0 %420, %v415
  %v422 = vpop.permute.xlu0 %421
  %425 = vset.pattern.permute.xlu0 33
  %426 = vperm.xlu0 %425, %v416
  %v427 = vpop.permute.xlu0 %426
  %430 = vset.pattern.permute.xlu0 33
  %431 = vperm.xlu0 %430, %v417
  %v432 = vpop.permute.xlu0 %431
  %435 = vset.pattern.permute.xlu0 33
  %436 = vperm.xlu0 %435, %v418
  %v437 = vpop.permute.xlu0 %436
  %v439 = vmul.f32 %v351, %v422
  %v440 = vmul.f32 %v352, %v427
  %v441 = vmul.f32 %v353, %v432
  %v442 = vmul.f32 %v354, %v437
  %443 = vset.pattern.permute.xlu0 34
  %444 = vperm.xlu0 %443, %v270
  %v445 = vpop.permute.xlu0 %444
  %447 = vset.pattern.permute.xlu0 34
  %448 = vperm.xlu0 %447, %v271
  %v449 = vpop.permute.xlu0 %448
  %451 = vset.pattern.permute.xlu0 34
  %452 = vperm.xlu0 %451, %v272
  %v453 = vpop.permute.xlu0 %452
  %455 = vset.pattern.permute.xlu0 34
  %456 = vperm.xlu0 %455, %v273
  %v457 = vpop.permute.xlu0 %456
  %v459 = vadd.f32 %v439, %v445
  %v460 = vadd.f32 %v440, %v449
  %v461 = vadd.f32 %v441, %v453
  %v462 = vadd.f32 %v442, %v457
  %s463 = scalar_lea.vmem %s1, 64
  %v464 = vld [vmem:[%s463] sm:$0xff]
  %v465 = vld [vmem:[%s463 + $0x8] sm:$0xff]
  %v466 = vld [vmem:[%s463 + $0x10] sm:$0xff]
  %v467 = vld [vmem:[%s463 + $0x18] sm:$0xff]
  %469 = vset.pattern.permute.xlu0 32
  %470 = vperm.xlu0 %469, %v464
  %v471 = vpop.permute.xlu0 %470
  %474 = vset.pattern.permute.xlu0 32
  %475 = vperm.xlu0 %474, %v465
  %v476 = vpop.permute.xlu0 %475
  %479 = vset.pattern.permute.xlu0 32
  %480 = vperm.xlu0 %479, %v466
  %v481 = vpop.permute.xlu0 %480
  %484 = vset.pattern.permute.xlu0 32
  %485 = vperm.xlu0 %484, %v467
  %v486 = vpop.permute.xlu0 %485
  %v488 = vsel %vm51, %v464, 0
  %v490 = vsel %vm51, %v465, 0
  %v492 = vsel %vm51, %v466, 0
  %v494 = vsel %vm51, %v467, 0
  %496 = vmatpush.msra.mxu0 0.0
  %497 = vmatpush.msra.mxu0 0.0
  %498 = vmatpush.msra.mxu0 0.0
  %499 = vmatpush.msra.mxu0 0.0
  %500 = vmatpush.msra.mxu0 0.0
  %501 = vmatpush.msra.mxu0 0.0
  %502 = vmatpush.msra.mxu0 0.0
  %503 = vmatpush.msra.mxu0 0.0
  %504 = vmatpush.msra.mxu0 0.0
  %505 = vmatpush.msra.mxu0 0.0
  %506 = vmatpush.msra.mxu0 0.0
  %507 = vmatpush.msra.mxu0 0.0
  %508 = vmatpush.msra.mxu0 %v462
  %509 = vmatpush.msra.mxu0 %v461
  %510 = vmatpush.msra.mxu0 %v460
  %511 = vmatpush.msra.mxu0 %v459
  %512 = vmatmul.f32.gmra.mxu0 %v488
  %v513 = vpop.f32.mrf.mxu0
  %v514 = vadd.f32 %v471, %v513
  %515 = vmatmul.f32.gmra.mxu0 %v490
  %v516 = vpop.f32.mrf.mxu0
  %v517 = vadd.f32 %v476, %v516
  %518 = vmatmul.f32.gmra.mxu0 %v492
  %v519 = vpop.f32.mrf.mxu0
  %v520 = vadd.f32 %v481, %v519
  %521 = vmatmul.f32.gmra.mxu0 %v494
  %v522 = vpop.f32.mrf.mxu0
  %v523 = vadd.f32 %v486, %v522
  %524 = vdwg.mxu0
  %v525 = vmul.f32 %v514, 0.01
  %v526 = vmul.f32 %v517, 0.01
  %v527 = vmul.f32 %v520, 0.01
  %v528 = vmul.f32 %v523, 0.01
  %v529 = vmax.f32 %v514, %v525
  %v530 = vmax.f32 %v517, %v526
  %v531 = vmax.f32 %v520, %v527
  %v532 = vmax.f32 %v523, %v528
  %533 = vadd.xlane.f32.xlu0 %v529
  %v534 = vpop.xlane.xlu0 %533
  %535 = vadd.xlane.f32.xlu0 %v530
  %v536 = vpop.xlane.xlu0 %535
  %537 = vadd.xlane.f32.xlu0 %v531
  %v538 = vpop.xlane.xlu0 %537
  %539 = vadd.xlane.f32.xlu0 %v532
  %v540 = vpop.xlane.xlu0 %539
  %v541 = vmul.f32 %v534, 0.0078125
  %v542 = vmul.f32 %v536, 0.0078125
  %v543 = vmul.f32 %v538, 0.0078125
  %v544 = vmul.f32 %v540, 0.0078125
  %v545 = vsub.f32 %v529, %v541
  %v546 = vsub.f32 %v530, %v542
  %v547 = vsub.f32 %v531, %v543
  %v548 = vsub.f32 %v532, %v544
  %v549 = vmul.f32 %v545, %v545
  %v550 = vmul.f32 %v546, %v546
  %v551 = vmul.f32 %v547, %v547
  %v552 = vmul.f32 %v548, %v548
  %553 = vadd.xlane.f32.xlu0 %v549
  %v554 = vpop.xlane.xlu0 %553
  %555 = vadd.xlane.f32.xlu0 %v550
  %v556 = vpop.xlane.xlu0 %555
  %557 = vadd.xlane.f32.xlu0 %v551
  %v558 = vpop.xlane.xlu0 %557
  %559 = vadd.xlane.f32.xlu0 %v552
  %v560 = vpop.xlane.xlu0 %559
  %v561 = vmul.f32 %v554, 0.0078125
  %v562 = vmul.f32 %v556, 0.0078125
  %v563 = vmul.f32 %v558, 0.0078125
  %v564 = vmul.f32 %v560, 0.0078125
  %v565 = vadd.f32 %v561, 1e-05
  %v566 = vadd.f32 %v562, 1e-05
  %v567 = vadd.f32 %v563, 1e-05
  %v568 = vadd.f32 %v564, 1e-05
  %v569 = vrsqrt.pop %v565
  %v570 = vmul.f32 %v569, %v565
  %v571 = vmul.f32 %v570, %v569
  %v572 = vmul.f32 0.5, %v571
  %v573 = vsub.f32 1.5, %v572
  %v574 = vmul.f32 %v569, %v573
  %vm575 = vweird.f32 %v565
  %vm576 = vweird.f32 %v569
  %vm577 = vmor %vm575, %vm576
  %v578 = vsel %vm577, %v569, %v574
  %v579 = vrsqrt.pop %v566
  %v580 = vmul.f32 %v579, %v566
  %v581 = vmul.f32 %v580, %v579
  %v582 = vmul.f32 0.5, %v581
  %v583 = vsub.f32 1.5, %v582
  %v584 = vmul.f32 %v579, %v583
  %vm585 = vweird.f32 %v566
  %vm586 = vweird.f32 %v579
  %vm587 = vmor %vm585, %vm586
  %v588 = vsel %vm587, %v579, %v584
  %v589 = vrsqrt.pop %v567
  %v590 = vmul.f32 %v589, %v567
  %v591 = vmul.f32 %v590, %v589
  %v592 = vmul.f32 0.5, %v591
  %v593 = vsub.f32 1.5, %v592
  %v594 = vmul.f32 %v589, %v593
  %vm595 = vweird.f32 %v567
  %vm596 = vweird.f32 %v589
  %vm597 = vmor %vm595, %vm596
  %v598 = vsel %vm597, %v589, %v594
  %v599 = vrsqrt.pop %v568
  %v600 = vmul.f32 %v599, %v568
  %v601 = vmul.f32 %v600, %v599
  %v602 = vmul.f32 0.5, %v601
  %v603 = vsub.f32 1.5, %v602
  %v604 = vmul.f32 %v599, %v603
  %vm605 = vweird.f32 %v568
  %vm606 = vweird.f32 %v599
  %vm607 = vmor %vm605, %vm606
  %v608 = vsel %vm607, %v599, %v604
  %v609 = vmul.f32 %v464, %v578
  %v610 = vmul.f32 %v465, %v588
  %v611 = vmul.f32 %v466, %v598
  %v612 = vmul.f32 %v467, %v608
  %614 = vset.pattern.permute.xlu0 33
  %615 = vperm.xlu0 %614, %v609
  %v616 = vpop.permute.xlu0 %615
  %619 = vset.pattern.permute.xlu0 33
  %620 = vperm.xlu0 %619, %v610
  %v621 = vpop.permute.xlu0 %620
  %624 = vset.pattern.permute.xlu0 33
  %625 = vperm.xlu0 %624, %v611
  %v626 = vpop.permute.xlu0 %625
  %629 = vset.pattern.permute.xlu0 33
  %630 = vperm.xlu0 %629, %v612
  %v631 = vpop.permute.xlu0 %630
  %v633 = vmul.f32 %v545, %v616
  %v634 = vmul.f32 %v546, %v621
  %v635 = vmul.f32 %v547, %v626
  %v636 = vmul.f32 %v548, %v631
  %637 = vset.pattern.permute.xlu0 34
  %638 = vperm.xlu0 %637, %v464
  %v639 = vpop.permute.xlu0 %638
  %641 = vset.pattern.permute.xlu0 34
  %642 = vperm.xlu0 %641, %v465
  %v643 = vpop.permute.xlu0 %642
  %645 = vset.pattern.permute.xlu0 34
  %646 = vperm.xlu0 %645, %v466
  %v647 = vpop.permute.xlu0 %646
  %649 = vset.pattern.permute.xlu0 34
  %650 = vperm.xlu0 %649, %v467
  %v651 = vpop.permute.xlu0 %650
  %v653 = vadd.f32 %v633, %v639
  %v654 = vadd.f32 %v634, %v643
  %v655 = vadd.f32 %v635, %v647
  %v656 = vadd.f32 %v636, %v651
  %s657 = scalar_lea.vmem %s1, 96
  %v658 = vld [vmem:[%s657] sm:$0xff]
  %v659 = vld [vmem:[%s657 + $0x8] sm:$0xff]
  %v660 = vld [vmem:[%s657 + $0x10] sm:$0xff]
  %v661 = vld [vmem:[%s657 + $0x18] sm:$0xff]
  %663 = vset.pattern.permute.xlu0 32
  %664 = vperm.xlu0 %663, %v658
  %v665 = vpop.permute.xlu0 %664
  %668 = vset.pattern.permute.xlu0 32
  %669 = vperm.xlu0 %668, %v659
  %v670 = vpop.permute.xlu0 %669
  %673 = vset.pattern.permute.xlu0 32
  %674 = vperm.xlu0 %673, %v660
  %v675 = vpop.permute.xlu0 %674
  %678 = vset.pattern.permute.xlu0 32
  %679 = vperm.xlu0 %678, %v661
  %v680 = vpop.permute.xlu0 %679
  %v682 = vsel %vm51, %v658, 0
  %v684 = vsel %vm51, %v659, 0
  %v686 = vsel %vm51, %v660, 0
  %v688 = vsel %vm51, %v661, 0
  %690 = vmatpush.msra.mxu0 0.0
  %691 = vmatpush.msra.mxu0 0.0
  %692 = vmatpush.msra.mxu0 0.0
  %693 = vmatpush.msra.mxu0 0.0
  %694 = vmatpush.msra.mxu0 0.0
  %695 = vmatpush.msra.mxu0 0.0
  %696 = vmatpush.msra.mxu0 0.0
  %697 = vmatpush.msra.mxu0 0.0
  %698 = vmatpush.msra.mxu0 0.0
  %699 = vmatpush.msra.mxu0 0.0
  %700 = vmatpush.msra.mxu0 0.0
  %701 = vmatpush.msra.mxu0 0.0
  %702 = vmatpush.msra.mxu0 %v656
  %703 = vmatpush.msra.mxu0 %v655
  %704 = vmatpush.msra.mxu0 %v654
  %705 = vmatpush.msra.mxu0 %v653
  %706 = vmatmul.f32.gmra.mxu0 %v682
  %v707 = vpop.f32.mrf.mxu0
  %v708 = vadd.f32 %v665, %v707
  %709 = vmatmul.f32.gmra.mxu0 %v684
  %v710 = vpop.f32.mrf.mxu0
  %v711 = vadd.f32 %v670, %v710
  %712 = vmatmul.f32.gmra.mxu0 %v686
  %v713 = vpop.f32.mrf.mxu0
  %v714 = vadd.f32 %v675, %v713
  %715 = vmatmul.f32.gmra.mxu0 %v688
  %v716 = vpop.f32.mrf.mxu0
  %v717 = vadd.f32 %v680, %v716
  %718 = vdwg.mxu0
  %719 = vxpose.xlu0.b32.start [1/16] %v708, 128
  %720 = vxpose.xlu0.b32.cont [2/16] %v711, 128
  %721 = vxpose.xlu0.b32.cont [3/16] %v714, 128
  %722 = vxpose.xlu0.b32.cont [4/16] %v717, 128
  %723 = vxpose.xlu0.b32.cont [5/16] 0.0, 128
  %724 = vxpose.xlu0.b32.cont [6/16] 0.0, 128
  %725 = vxpose.xlu0.b32.cont [7/16] 0.0, 128
  %726 = vxpose.xlu0.b32.cont [8/16] 0.0, 128
  %727 = vxpose.xlu0.b32.cont [9/16] 0.0, 128
  %728 = vxpose.xlu0.b32.cont [10/16] 0.0, 128
  %729 = vxpose.xlu0.b32.cont [11/16] 0.0, 128
  %730 = vxpose.xlu0.b32.cont [12/16] 0.0, 128
  %731 = vxpose.xlu0.b32.cont [13/16] 0.0, 128
  %732 = vxpose.xlu0.b32.cont [14/16] 0.0, 128
  %733 = vxpose.xlu0.b32.cont [15/16] 0.0, 128
  %734 = vxpose.xlu0.b32.end [16/16] 0.0, 128
  %v735 = vpop.trf.xlu0
  %v736 = vpop.trf.xlu0
  %v737 = vpop.trf.xlu0
  %v738 = vpop.trf.xlu0
  %v739 = vpop.trf.xlu0
  %v740 = vpop.trf.xlu0
  %v741 = vpop.trf.xlu0
  %v742 = vpop.trf.xlu0
  %v743 = vpop.trf.xlu0
  %v744 = vpop.trf.xlu0
  %v745 = vpop.trf.xlu0
  %v746 = vpop.trf.xlu0
  %v747 = vpop.trf.xlu0
  %v748 = vpop.trf.xlu0
  %v749 = vpop.trf.xlu0
  %v750 = vpop.trf.xlu0
  %751 = vst.msk [vmem:[%s2] sm:$0xff] %vm51, %v735
  %752 = vst.msk [vmem:[%s2 + $0x8] sm:$0xff] %vm51, %v736
  %753 = vst.msk [vmem:[%s2 + $0x10] sm:$0xff] %vm51, %v737
  %754 = vst.msk [vmem:[%s2 + $0x18] sm:$0xff] %vm51, %v738
  %755 = vst.msk [vmem:[%s2 + $0x20] sm:$0xff] %vm51, %v739
  %756 = vst.msk [vmem:[%s2 + $0x28] sm:$0xff] %vm51, %v740
  %757 = vst.msk [vmem:[%s2 + $0x30] sm:$0xff] %vm51, %v741
  %758 = vst.msk [vmem:[%s2 + $0x38] sm:$0xff] %vm51, %v742
  %759 = vst.msk [vmem:[%s2 + $0x40] sm:$0xff] %vm51, %v743
  %760 = vst.msk [vmem:[%s2 + $0x48] sm:$0xff] %vm51, %v744
  %761 = vst.msk [vmem:[%s2 + $0x50] sm:$0xff] %vm51, %v745
  %762 = vst.msk [vmem:[%s2 + $0x58] sm:$0xff] %vm51, %v746
  %763 = vst.msk [vmem:[%s2 + $0x60] sm:$0xff] %vm51, %v747
  %764 = vst.msk [vmem:[%s2 + $0x68] sm:$0xff] %vm51, %v748
  %765 = vst.msk [vmem:[%s2 + $0x70] sm:$0xff] %vm51, %v749
  %766 = vst.msk [vmem:[%s2 + $0x78] sm:$0xff] %vm51, %v750
  // Predicated region
  $region10: #{full_autoencoder_forward.1} parent=0 // pred_check
    _
  $region11: #{full_autoencoder_forward.1} parent=0 // pred_check_branch
    %768 = sbr.rel (0) target = $region13
  $region12: #{full_autoencoder_forward.1} parent=0 // pred_region
    _
  $region13: #{full_autoencoder_forward.1} parent=0 // pred_fallthru
    _
  // Predicated region
  $region14: #{full_autoencoder_forward.1} parent=0 // pred_check
    _
  $region15: #{full_autoencoder_forward.1} parent=0 // pred_check_branch
    %770 = sbr.rel (0) target = $region17
  $region16: #{full_autoencoder_forward.1} parent=0 // pred_region
    _
  $region17: #{full_autoencoder_forward.1} parent=0 // pred_fallthru
    _

</llo_original>
